<compile_context>
chip_gen: v5e
topology: v5e:2x2
jax: 0.10.0
libtpu: 0.0.40
codegen_flags: <defaults>
</compile_context>

<pallas_src>
import jax
import jax.numpy as jnp
from jax.experimental import pallas as pl
from jax.experimental.pallas import tpu as pltpu

_B_TILE_MAX = 2048   # rows per grid step
_C_PAD = 16          # classifier head padded to a small sublane-friendly width


def _round_up(x, m):
    return (x + m - 1) // m * m


def classifier_kernel(x_ref, w1t_ref, b1_ref, w2t_ref, b2_ref, o_ref):
    # x:   (b_tile, D)      f32 (native input dtype; cast to bf16 in-kernel)
    # w1t: (D, D)           bf16 (already transposed: in x out)
    # b1:  (1, D)           f32
    # w2t: (D, C_pad)       bf16, C zero-padded to C_pad
    # b2:  (1, C_pad)       f32 (zero-padded)
    # o:   (b_tile, C_pad)  f32
    x = x_ref[...].astype(w1t_ref.dtype)
    # First Linear: MXU matmul with f32 accumulation; bias + ReLU in f32 (VPU).
    h = jnp.dot(x, w1t_ref[...], preferred_element_type=jnp.float32)
    h = jnp.maximum(h + b1_ref[...], 0.0)
    # Second Linear: cast activation to the MXU compute dtype, keep f32 acc.
    out = jnp.dot(h.astype(w2t_ref.dtype), w2t_ref[...],
                  preferred_element_type=jnp.float32)
    o_ref[...] = (out + b2_ref[...]).astype(o_ref.dtype)


def prepare_classifier_params(w1, b1, w2, b2, *, compute_dtype=jnp.bfloat16):
    """One-time parameter prep (PyTorch layout in, kernel layout out).

    PyTorch nn.Linear stores weight as (out, in) and computes y = x @ W.T + b.
    Transpose once, zero-pad the head to a small fixed width, and cast the
    matmul operands to the MXU compute dtype.  Biases stay f32.
    """
    D = w1.shape[1]
    C = w2.shape[0]
    c_pad = _round_up(C, _C_PAD)

    w1t = jnp.transpose(w1).astype(compute_dtype)                      # (D, D)
    w2t = jnp.zeros((D, c_pad), compute_dtype).at[:, :C].set(
        jnp.transpose(w2).astype(compute_dtype))                       # (D, C_pad)
    b1r = b1.astype(jnp.float32).reshape(1, D)                         # (1, D)
    b2r = jnp.zeros((1, c_pad), jnp.float32).at[:, :C].set(
        b2.astype(jnp.float32).reshape(1, C))                          # (1, C_pad)
    return w1t, b1r, w2t, b2r


def _choose_batch_tile(B, tile_max=_B_TILE_MAX):
    """Pick a batch tile that (a) minimizes padding and (b) yields >=2 grid
    steps whenever possible so v7x's two TensorCores both get work."""
    steps = max(1, -(-B // tile_max))          # cdiv(B, tile_max)
    if B >= 32:
        steps = max(steps, 2)                  # megacore: at least 2 parallel steps
    b_tile = _round_up(-(-B // steps), 16)     # round_up(cdiv(B, steps), 16)
    return b_tile


def classifier_forward(x, w1t, b1r, w2t, b2r, nclasses):
    """x: (B, D) float32; prepped params from prepare_classifier_params."""
    B, D = x.shape
    c_pad = w2t.shape[1]

    b_tile = _choose_batch_tile(B)
    b_pad = _round_up(B, b_tile)
    xp = x if b_pad == B else jnp.pad(x, ((0, b_pad - B), (0, 0)))

    grid = (b_pad // b_tile,)

    # Advisory cost: memory-bound, no transcendentals.
    flops = 2 * b_pad * D * (D + c_pad)
    bytes_accessed = (
        b_pad * D * 4                      # x (f32)
        + D * D * 2 + D * 4                # W1 (bf16) + b1 (f32)
        + D * c_pad * 2 + c_pad * 4        # W2 (bf16) + b2 (f32)
        + b_pad * c_pad * 4                # out (f32)
    )

    out = pl.pallas_call(
        classifier_kernel,
        out_shape=jax.ShapeDtypeStruct((b_pad, c_pad), jnp.float32),
        grid=grid,
        in_specs=[
            pl.BlockSpec((b_tile, D), lambda i: (i, 0)),   # x streams per tile
            pl.BlockSpec((D, D), lambda i: (0, 0)),        # W1 resident
            pl.BlockSpec((1, D), lambda i: (0, 0)),        # b1 resident
            pl.BlockSpec((D, c_pad), lambda i: (0, 0)),    # W2 resident
            pl.BlockSpec((1, c_pad), lambda i: (0, 0)),    # b2 resident
        ],
        out_specs=pl.BlockSpec((b_tile, c_pad), lambda i: (i, 0)),
        compiler_params=pltpu.CompilerParams(
            dimension_semantics=("parallel",),             # shard B over TCs (v7x)
        ),
        cost_estimate=pl.CostEstimate(
            flops=flops, transcendentals=0, bytes_accessed=bytes_accessed),
    )(xp, w1t, b1r, w2t, b2r)
    return out[:B, :nclasses]


if __name__ == "__main__":
    # opt.ndim = 32 -> ndf = 16 -> feature dim = 2*ndf = 32 ; nclasses = 10
    ndim = 32
    ndf = ndim // 2
    D = 2 * ndf
    nclasses = 10
    B = 8

    key = jax.random.PRNGKey(0)
    kx, kw1, kb1, kw2, kb2, kx2 = jax.random.split(key, 6)

    bound = 1.0 / jnp.sqrt(jnp.array(D, jnp.float32))
    x = jax.random.normal(kx, (B, D), dtype=jnp.float32)
    w1 = jax.random.uniform(kw1, (D, D), jnp.float32, -bound, bound)   # (out, in)
    b1 = jax.random.uniform(kb1, (D,), jnp.float32, -bound, bound)
    w2 = jax.random.uniform(kw2, (nclasses, D), jnp.float32, -bound, bound)
    b2 = jax.random.uniform(kb2, (nclasses,), jnp.float32, -bound, bound)

    # One-time parameter prep (transpose / pad / bf16 cast).
    w1t, b1r, w2t, b2r = prepare_classifier_params(w1, b1, w2, b2)

    out = classifier_forward(x, w1t, b1r, w2t, b2r, nclasses)
    out = jax.block_until_ready(out)
    assert out.shape == (B, nclasses)

    # Reference using the SAME bf16-matmul / f32-accumulate recipe.
    def ref_fn(xs):
        h = jnp.dot(xs.astype(jnp.bfloat16), w1.T.astype(jnp.bfloat16),
                    preferred_element_type=jnp.float32) + b1
        h = jnp.maximum(h, 0.0)
        return jnp.dot(h.astype(jnp.bfloat16), w2.T.astype(jnp.bfloat16),
                       preferred_element_type=jnp.float32) + b2

    ref = ref_fn(x)
    assert jnp.allclose(out, ref, atol=1e-3, rtol=1e-3)

    # Sanity check against the full-f32 module semantics (bf16 tolerance).
    ref_f32 = jnp.maximum(x @ w1.T + b1, 0.0) @ w2.T + b2
    assert jnp.allclose(out, ref_f32, atol=5e-2, rtol=5e-2)

    # Exercise the batched / padded multi-step grid path (B=600 -> 2x304 tiles).
    B2 = 600
    x2 = jax.random.normal(kx2, (B2, D), dtype=jnp.float32)
    out2 = jax.block_until_ready(
        classifier_forward(x2, w1t, b1r, w2t, b2r, nclasses))
    assert out2.shape == (B2, nclasses)
    assert jnp.allclose(out2, ref_fn(x2), atol=1e-3, rtol=1e-3)

    print("KERNEL_OK")
</pallas_src>

<mosaic_0001>
module attributes {stable_mosaic.version = 11 : i64} {
  func.func @classifier_kernel(%arg0: i32, %arg1: memref<16x32xf32, #tpu.memory_space<vmem>>, %arg2: memref<32x32xbf16, #tpu.memory_space<vmem>>, %arg3: memref<1x32xf32, #tpu.memory_space<vmem>>, %arg4: memref<32x16xbf16, #tpu.memory_space<vmem>>, %arg5: memref<1x16xf32, #tpu.memory_space<vmem>>, %arg6: memref<16x16xf32, #tpu.memory_space<vmem>>) attributes {dimension_semantics = [#tpu.dimension_semantics<parallel>], iteration_bounds = array<i64: 1>, scalar_prefetch = 0 : i64, scratch_operands = 0 : i64, tpu.core_type = #tpu.core_type<tc>, window_params = [{transform_indices = @transform_0, window_bounds = array<i64: 16, 32>}, {pipeline_mode = #tpu.pipeline_mode<synchronous>, transform_indices = @transform_1, window_bounds = array<i64: 32, 32>}, {pipeline_mode = #tpu.pipeline_mode<synchronous>, transform_indices = @transform_2, window_bounds = array<i64: 1, 32>}, {pipeline_mode = #tpu.pipeline_mode<synchronous>, transform_indices = @transform_3, window_bounds = array<i64: 32, 16>}, {pipeline_mode = #tpu.pipeline_mode<synchronous>, transform_indices = @transform_4, window_bounds = array<i64: 1, 16>}, {transform_indices = @transform_5, window_bounds = array<i64: 16, 16>}]} {
    %c0 = arith.constant 0 : index
    %c0_0 = arith.constant 0 : index
    %0 = vector.load %arg1[%c0, %c0_0] : memref<16x32xf32, #tpu.memory_space<vmem>>, vector<16x32xf32>
    %1 = arith.truncf %0 : vector<16x32xf32> to vector<16x32xbf16>
    %c0_1 = arith.constant 0 : index
    %c0_2 = arith.constant 0 : index
    %2 = vector.load %arg2[%c0_1, %c0_2] : memref<32x32xbf16, #tpu.memory_space<vmem>>, vector<32x32xbf16>
    %cst = arith.constant dense<0.000000e+00> : vector<16x32xf32>
    %3 = tpu.matmul %1, %2, %cst {dimension_numbers = #tpu.dot_dimension_numbers<[1], [0], [0], [1], [0, 0, 1, 1], [], []>} : vector<16x32xbf16>, vector<32x32xbf16>, vector<16x32xf32> -> vector<16x32xf32>
    %c0_3 = arith.constant 0 : index
    %c0_4 = arith.constant 0 : index
    %4 = vector.load %arg3[%c0_3, %c0_4] : memref<1x32xf32, #tpu.memory_space<vmem>>, vector<1x32xf32>
    %5 = vector.broadcast %4 : vector<1x32xf32> to vector<16x32xf32>
    %6 = arith.addf %3, %5 : vector<16x32xf32>
    %cst_5 = arith.constant 0.000000e+00 : f32
    %7 = vector.broadcast %cst_5 : f32 to vector<16x32xf32>
    %8 = arith.maximumf %6, %7 : vector<16x32xf32>
    %9 = arith.truncf %8 : vector<16x32xf32> to vector<16x32xbf16>
    %c0_6 = arith.constant 0 : index
    %c0_7 = arith.constant 0 : index
    %10 = vector.load %arg4[%c0_6, %c0_7] : memref<32x16xbf16, #tpu.memory_space<vmem>>, vector<32x16xbf16>
    %cst_8 = arith.constant dense<0.000000e+00> : vector<16x16xf32>
    %11 = tpu.matmul %9, %10, %cst_8 {dimension_numbers = #tpu.dot_dimension_numbers<[1], [0], [0], [1], [0, 0, 1, 1], [], []>} : vector<16x32xbf16>, vector<32x16xbf16>, vector<16x16xf32> -> vector<16x16xf32>
    %c0_9 = arith.constant 0 : index
    %c0_10 = arith.constant 0 : index
    %12 = vector.load %arg5[%c0_9, %c0_10] : memref<1x16xf32, #tpu.memory_space<vmem>>, vector<1x16xf32>
    %13 = vector.broadcast %12 : vector<1x16xf32> to vector<16x16xf32>
    %14 = arith.addf %11, %13 : vector<16x16xf32>
    %c0_11 = arith.constant 0 : index
    %c0_12 = arith.constant 0 : index
    %15 = vector.load %arg6[%c0_11, %c0_12] : memref<16x16xf32, #tpu.memory_space<vmem>>, vector<16x16xf32>
    tpu.vector_store %arg6[%c0_11, %c0_12], %14 {strides = array<i32>} : memref<16x16xf32, #tpu.memory_space<vmem>>, vector<16x16xf32>,
    return
  }
  func.func @transform_0(%arg0: i32) -> (i32, i32) {
    %c0_i32 = arith.constant 0 : i32
    %c0_i32_0 = arith.constant 0 : i32
    return %arg0, %c0_i32 : i32, i32
  }
  func.func @transform_1(%arg0: i32) -> (i32, i32) {
    %c0_i32 = arith.constant 0 : i32
    %c0_i32_0 = arith.constant 0 : i32
    %c0_i32_1 = arith.constant 0 : i32
    return %c0_i32, %c0_i32_0 : i32, i32
  }
  func.func @transform_2(%arg0: i32) -> (i32, i32) {
    %c0_i32 = arith.constant 0 : i32
    %c0_i32_0 = arith.constant 0 : i32
    %c0_i32_1 = arith.constant 0 : i32
    return %c0_i32, %c0_i32_0 : i32, i32
  }
  func.func @transform_3(%arg0: i32) -> (i32, i32) {
    %c0_i32 = arith.constant 0 : i32
    %c0_i32_0 = arith.constant 0 : i32
    %c0_i32_1 = arith.constant 0 : i32
    return %c0_i32, %c0_i32_0 : i32, i32
  }
  func.func @transform_4(%arg0: i32) -> (i32, i32) {
    %c0_i32 = arith.constant 0 : i32
    %c0_i32_0 = arith.constant 0 : i32
    %c0_i32_1 = arith.constant 0 : i32
    return %c0_i32, %c0_i32_0 : i32, i32
  }
  func.func @transform_5(%arg0: i32) -> (i32, i32) {
    %c0_i32 = arith.constant 0 : i32
    %c0_i32_0 = arith.constant 0 : i32
    return %arg0, %c0_i32 : i32, i32
  }
}

</mosaic_0001>

<llo_original>
// kernel: tpu_custom_call.1
$region0: #{tpu_custom_call.1}
  #allocation0 [shape = 'u32[]', space=smem, size = 0x4, offset = 0x4, fixed_abs, tag = 'smem constant byte address 0x4 - core index']
  #allocation1 [shape = 'u32[72,128]{1,0:T(1,128)}', space=vmem, size = 0x9000, scoped, tag = 'internal scratch']
  %s0 = inlined_call_operand.vmem [shape: f32[16,32], index: 0, kind: input, shape index: {}]
  %s1 = inlined_call_operand.hbm [shape: bf16[32,32], index: 1, kind: input, shape index: {}]
  %s2 = inlined_call_operand.vmem [shape: f32[1,32], index: 2, kind: input, shape index: {}]
  %s3 = inlined_call_operand.vmem [shape: bf16[32,16], index: 3, kind: input, shape index: {}]
  %s4 = inlined_call_operand.vmem [shape: f32[1,16], index: 4, kind: input, shape index: {}]
  %s5 = inlined_call_operand.hbm [shape: f32[16,16], index: 5, kind: output, shape index: {}]
  %s6 = sld [smem:[#allocation0]]
  $region34: #{tpu_custom_call.1} parent=0
    _
  %s8 = ssub.s32 1, %s6
  %s9 = scalar_select 0, %s8, %s6
  $region1: #{tpu_custom_call.1} parent=0
    #allocation2 [shape = 'u8[8192]{0}', space=vmem, size = 0x2000, scoped, tag = 'input window, operand 1, single buffered']
    #allocation3 [shape = 's32[1]{0}', space=sflag, size = 0x4, scoped, tag = 'scoped memory for tpu_custom_call.1']
    #allocation4 [shape = 's32[1]{0}', space=sflag, size = 0x4, scoped, tag = 'scoped memory for tpu_custom_call.1']
    #allocation5 [shape = 'u8[8192]{0}', space=vmem, size = 0x2000, scoped, tag = 'output window, operand 0, single buffered']
    %10 = vsyncpa [#allocation3], 0
    %11 = vsyncpa [#allocation4], 0
    // Predicated region
    $region2: #{tpu_custom_call.1} parent=1 // pred_check
      _
    $region3: #{tpu_custom_call.1} parent=1 // pred_check_branch
      %13 = sbr.rel (0) target = $region5
    $region4: #{tpu_custom_call.1} parent=1 // pred_region
      _
    $region5: #{tpu_custom_call.1} parent=1 // pred_fallthru
      _
    // Predicated region
    $region6: #{tpu_custom_call.1} parent=1 // pred_check
      _
    $region7: #{tpu_custom_call.1} parent=1 // pred_check_branch
      %15 = sbr.rel (0) target = $region9
    $region8: #{tpu_custom_call.1} parent=1 // pred_region
      %17 = vsyncadd [#allocation3], 0
      %s18 = sshll.u32 %s1, 4
      %s19 = int_to_ptr.hbm [resolvable:$true] %s18
      %s20 = sshll.u32 [#allocation2], 4
      %s21 = int_to_ptr.vmem [resolvable:$true] %s20
      %26 = dma.hbm_to_vmem [thread:$0]  %s19, 256, %s21, [#allocation3], 64, 64, 4
    $region9: #{tpu_custom_call.1} parent=1 // pred_fallthru
      _
    // Predicated region
    $region10: #{tpu_custom_call.1} parent=1 // pred_check
      _
    $region11: #{tpu_custom_call.1} parent=1 // pred_check_branch
      %28 = sbr.rel (0) target = $region13
    $region12: #{tpu_custom_call.1} parent=1 // pred_region
      _
    $region13: #{tpu_custom_call.1} parent=1 // pred_fallthru
      _
    // Predicated region
    $region14: #{tpu_custom_call.1} parent=1 // pred_check
      _
    $region15: #{tpu_custom_call.1} parent=1 // pred_check_branch
      %30 = sbr.rel (0) target = $region17
    $region16: #{tpu_custom_call.1} parent=1 // pred_region
      _
    $region17: #{tpu_custom_call.1} parent=1 // pred_fallthru
      _
    // Predicated region
    $region18: #{tpu_custom_call.1} parent=1 // pred_check
      _
    $region19: #{tpu_custom_call.1} parent=1 // pred_check_branch
      %32 = sbr.rel (0) target = $region21
    $region20: #{tpu_custom_call.1} parent=1 // pred_region
      _
    $region21: #{tpu_custom_call.1} parent=1 // pred_fallthru
      _
    // Predicated region
    $region22: #{tpu_custom_call.1} parent=1 // pred_check
      _
    $region23: #{tpu_custom_call.1} parent=1 // pred_check_branch
      %34 = sbr.rel (0) target = $region25
    $region24: #{tpu_custom_call.1} parent=1 // pred_region
      %36 = dma.done [#allocation3], 256
    $region25: #{tpu_custom_call.1} parent=1 // pred_fallthru
      _
    %v38 = vld [vmem:[%s0] sm:$0xff]
    %v39 = vld [vmem:[%s0 + $0x8] sm:$0xff]
    %v40 = vpack.c.bf16 %v39, %v38
    %v41 = vld [vmem:[#allocation2] sm:$0xf]
    %v42 = vld [vmem:[#allocation2 + $0x4] sm:$0xf]
    %v43 = vld [vmem:[#allocation2 + $0x8] sm:$0xf]
    %v44 = vld [vmem:[#allocation2 + $0xc] sm:$0xf]
    %v45 = vld [vmem:[%s2] sm:$0x1]
    %v47 = vperm.slane %v45, 0
    %v53 = vunpack.c.l.b16 %v41
    %v54 = vunpack.c.l.b16 %v42
    %v55 = vunpack.c.l.b16 %v43
    %v56 = vunpack.c.l.b16 %v44
    %v57 = vpack.c.b16 %v54, %v53
    %v58 = vpack.c.b16 %v56, %v55
    %vm61 = vcmask 261120
    %v63 = vsel %vm61, %v40, 0
    %65 = vmatpush.bf16.msra.mxu0 0
    %66 = vmatpush.bf16.msra.mxu0 0
    %67 = vmatpush.bf16.msra.mxu0 0
    %68 = vmatpush.bf16.msra.mxu0 0
    %69 = vmatpush.bf16.msra.mxu0 0
    %70 = vmatpush.bf16.msra.mxu0 0
    %71 = vmatpush.bf16.msra.mxu0 %v58
    %72 = vmatpush.bf16.msra.mxu0 %v57
    %73 = vmatmul.bf16.gmra.mxu0 %v63
    %v74 = vpop.f32.mrf.mxu0
    %v75 = vadd.f32 %v47, %v74
    %v76 = vpop.f32.mrf.mxu0
    %v77 = vadd.f32 %v47, %v76
    %78 = vdwg.mxu0
    %v79 = vmax.f32 %v75, 0.0
    %v80 = vmax.f32 %v77, 0.0
    %v81 = vpack.c.bf16 %v80, %v79
    %v82 = vld [vmem:[%s3] sm:$0xf]
    %v83 = vld [vmem:[%s3 + $0x4] sm:$0xf]
    %v84 = vld [vmem:[%s3 + $0x8] sm:$0xf]
    %v85 = vld [vmem:[%s3 + $0xc] sm:$0xf]
    %v86 = vld [vmem:[%s4] sm:$0x1]
    %v88 = vperm.slane %v86, 0
    %v94 = vunpack.c.l.b16 %v82
    %v95 = vunpack.c.l.b16 %v83
    %v96 = vunpack.c.l.b16 %v84
    %v97 = vunpack.c.l.b16 %v85
    %v98 = vpack.c.b16 %v95, %v94
    %v99 = vpack.c.b16 %v97, %v96
    %v103 = vsel %vm61, %v81, 0
    %105 = vmatpush.bf16.msra.mxu0 0
    %106 = vmatpush.bf16.msra.mxu0 0
    %107 = vmatpush.bf16.msra.mxu0 0
    %108 = vmatpush.bf16.msra.mxu0 0
    %109 = vmatpush.bf16.msra.mxu0 0
    %110 = vmatpush.bf16.msra.mxu0 0
    %111 = vmatpush.bf16.msra.mxu0 %v99
    %112 = vmatpush.bf16.msra.mxu0 %v98
    %113 = vmatmul.bf16.gmra.mxu0 %v103
    %v114 = vpop.f32.mrf.mxu0
    %v115 = vadd.f32 %v88, %v114
    %v116 = vpop.f32.mrf.mxu0
    %v117 = vadd.f32 %v88, %v116
    %118 = vdwg.mxu0
    %vm119 = vcmask 130048
    %120 = vst.msk [vmem:[#allocation5] sm:$0xff] %vm119, %v115
    %121 = vst.msk [vmem:[#allocation5 + $0x8] sm:$0xff] %vm119, %v117
    // Predicated region
    $region26: #{tpu_custom_call.1} parent=1 // pred_check
      _
    $region27: #{tpu_custom_call.1} parent=1 // pred_check_branch
      %123 = sbr.rel (0) target = $region29
    $region28: #{tpu_custom_call.1} parent=1 // pred_region
      %125 = vsyncadd [#allocation4], 0
      %s126 = sshll.u32 [#allocation5], 4
      %s127 = int_to_ptr.vmem [resolvable:$true] %s126
      %s128 = sshll.u32 %s5, 4
      %s129 = int_to_ptr.hbm [resolvable:$true] %s128
      %134 = dma.vmem_to_hbm [thread:$0]  %s127, 256, %s129, [#allocation4], 128, 128, 8
    $region29: #{tpu_custom_call.1} parent=1 // pred_fallthru
      _
    // Predicated region
    $region30: #{tpu_custom_call.1} parent=1 // pred_check
      _
    $region31: #{tpu_custom_call.1} parent=1 // pred_check_branch
      %136 = sbr.rel (0) target = $region33
    $region32: #{tpu_custom_call.1} parent=1 // pred_region
      %138 = dma.done [#allocation4], 256
    $region33: #{tpu_custom_call.1} parent=1 // pred_fallthru
      _
    %139 = vsyncpa [#allocation3], 1
    %140 = vsyncpa [#allocation4], 1

</llo_original>
